<compile_context>
chip_gen: v6e
topology: v6e:2x2x1
jax: 0.10.0
libtpu: 0.0.40
codegen_flags: <defaults>
</compile_context>

<pallas_src>
import jax
import jax.numpy as jnp
from jax.experimental import pallas as pl
from jax.experimental.pallas import tpu as pltpu

_LANES = 128           # vreg lane width; lane-dense last dim
_MAX_BLOCK_ROWS = 512  # (512, 128) f32 tile = 256 KiB/buffer; VMEM-safe on v5e/v6e/v7x


def _affine_tanh_kernel(w_ref, b_ref, x_ref, o_ref):
    # w_ref, b_ref: (1, 1) scalars in SMEM
    # x_ref, o_ref: lane-dense f32 tiles in VMEM
    w = w_ref[0, 0]
    b = b_ref[0, 0]
    o_ref[...] = jnp.tanh(x_ref[...] * w + b)


def keypoint_estimator_angle_forward(emo, weight, bias):
    """tanh(w * emo + b) for nn.Linear(1, 1) + tanh.

    emo: (..., 1) f32; weight: (1, 1) f32; bias: (1,) f32 -> same shape as emo.
    """
    orig_shape = emo.shape
    assert orig_shape[-1] == 1, "Linear(1, 1) expects trailing feature dim of size 1"

    w = weight.reshape(1, 1).astype(jnp.float32)   # scalar weight -> SMEM
    b = bias.reshape(1, 1).astype(jnp.float32)     # scalar bias   -> SMEM

    n = emo.size
    smem_spec = pl.BlockSpec(memory_space=pltpu.MemorySpace.SMEM)
    vmem_spec = pl.BlockSpec(memory_space=pltpu.MemorySpace.VMEM)

    if n % _LANES == 0:
        rows = n // _LANES
        x2d = emo.reshape(rows, _LANES)            # lane-dense: last dim = 128
        if rows <= _MAX_BLOCK_ROWS:
            # Small / medium: single gridless call, whole slab resident in VMEM.
            out2d = pl.pallas_call(
                _affine_tanh_kernel,
                out_shape=jax.ShapeDtypeStruct((rows, _LANES), jnp.float32),
                in_specs=[smem_spec, smem_spec, vmem_spec],
                out_specs=vmem_spec,
            )(w, b, x2d)
        else:
            # Large: lane-dense tiled pipeline; row axis is "parallel" so it
            # shards across the 2 TensorCores on v7x (harmless on v5e/v6e).
            grid = (pl.cdiv(rows, _MAX_BLOCK_ROWS),)
            out2d = pl.pallas_call(
                _affine_tanh_kernel,
                out_shape=jax.ShapeDtypeStruct((rows, _LANES), jnp.float32),
                grid=grid,
                in_specs=[
                    smem_spec,
                    smem_spec,
                    pl.BlockSpec((_MAX_BLOCK_ROWS, _LANES), lambda i: (i, 0)),
                ],
                out_specs=pl.BlockSpec((_MAX_BLOCK_ROWS, _LANES), lambda i: (i, 0)),
                compiler_params=pltpu.CompilerParams(
                    dimension_semantics=("parallel",)),
            )(w, b, x2d)
    else:
        # Tiny / ragged element counts (e.g. the module's (2, 8, 1) shape):
        # one lane-dense row (largest dim last), no grid at all.
        x2d = emo.reshape(1, n)
        out2d = pl.pallas_call(
            _affine_tanh_kernel,
            out_shape=jax.ShapeDtypeStruct((1, n), jnp.float32),
            in_specs=[smem_spec, smem_spec, vmem_spec],
            out_specs=vmem_spec,
        )(w, b, x2d)

    return out2d.reshape(orig_shape)


if __name__ == "__main__":
    key = jax.random.PRNGKey(0)
    k_x, k_w, k_b, k_x2, k_x3 = jax.random.split(key, 5)

    # Deterministic "parameters" for nn.Linear(1, 1): weight (1, 1), bias (1,)
    weight = jax.random.normal(k_w, (1, 1), dtype=jnp.float32)
    bias = jax.random.normal(k_b, (1,), dtype=jnp.float32)

    def ref_fn(x):
        return jnp.tanh(x * weight[0, 0] + bias[0])

    # 1) Module's native small shape: batch=2, seq=8, feature=1  (gridless, (1, 16))
    emo = jax.random.normal(k_x, (2, 8, 1), dtype=jnp.float32)
    out = jax.block_until_ready(keypoint_estimator_angle_forward(emo, weight, bias))
    assert out.shape == (2, 8, 1)
    assert jnp.allclose(out, ref_fn(emo), atol=1e-5), "mismatch vs reference (small)"

    # 2) Lane-dense gridless path: (2, 1024, 1) -> (16, 128) single VMEM slab.
    emo2 = jax.random.normal(k_x2, (2, 1024, 1), dtype=jnp.float32)
    out2 = jax.block_until_ready(keypoint_estimator_angle_forward(emo2, weight, bias))
    assert out2.shape == emo2.shape
    assert jnp.allclose(out2, ref_fn(emo2), atol=1e-5), "mismatch vs reference (medium)"

    # 3) Tiled pipelined path: (1, 131072, 1) -> (1024, 128), grid=(2,), parallel.
    emo3 = jax.random.normal(k_x3, (1, 131072, 1), dtype=jnp.float32)
    out3 = jax.block_until_ready(keypoint_estimator_angle_forward(emo3, weight, bias))
    assert out3.shape == emo3.shape
    assert jnp.allclose(out3, ref_fn(emo3), atol=1e-5), "mismatch vs reference (large)"

    print("KERNEL_OK")
</pallas_src>

<mosaic_0001>
module attributes {stable_mosaic.version = 11 : i64} {
  func.func @_affine_tanh_kernel(%arg0: memref<1x1xf32, #tpu.memory_space<smem>>, %arg1: memref<1x1xf32, #tpu.memory_space<smem>>, %arg2: memref<1x16xf32, #tpu.memory_space<vmem>>, %arg3: memref<1x16xf32, #tpu.memory_space<vmem>>) attributes {dimension_semantics = [], scalar_prefetch = 0 : i64, scratch_operands = 0 : i64, tpu.core_type = #tpu.core_type<tc>} {
    %c0 = arith.constant 0 : index
    %c0_0 = arith.constant 0 : index
    %0 = memref.load %arg0[%c0, %c0_0] : memref<1x1xf32, #tpu.memory_space<smem>>
    %c0_1 = arith.constant 0 : index
    %c0_2 = arith.constant 0 : index
    %1 = memref.load %arg1[%c0_1, %c0_2] : memref<1x1xf32, #tpu.memory_space<smem>>
    %c0_3 = arith.constant 0 : index
    %c0_4 = arith.constant 0 : index
    %2 = vector.load %arg2[%c0_3, %c0_4] : memref<1x16xf32, #tpu.memory_space<vmem>>, vector<1x16xf32>
    %3 = vector.broadcast %0 : f32 to vector<1x16xf32>
    %4 = arith.mulf %2, %3 : vector<1x16xf32>
    %5 = vector.broadcast %1 : f32 to vector<1x16xf32>
    %6 = arith.addf %4, %5 : vector<1x16xf32>
    %7 = math.tanh %6 : vector<1x16xf32>
    %c0_5 = arith.constant 0 : index
    %c0_6 = arith.constant 0 : index
    %8 = vector.load %arg3[%c0_5, %c0_6] : memref<1x16xf32, #tpu.memory_space<vmem>>, vector<1x16xf32>
    tpu.vector_store %arg3[%c0_5, %c0_6], %7 {strides = array<i32>} : memref<1x16xf32, #tpu.memory_space<vmem>>, vector<1x16xf32>,
    return
  }
}

</mosaic_0001>

<llo_original>
// kernel: tpu_custom_call.1
$region0: #{tpu_custom_call.1}
  #allocation0 [shape = 'u32[]', space=smem, size = 0x4, offset = 0x4, fixed_abs, tag = 'smem constant byte address 0x4 - core index']
  #allocation1 [shape = 'u32[144,128]{1,0:T(1,128)}', space=vmem, size = 0x12000, scoped, tag = 'internal scratch']
  #allocation2 [shape = 'f32[1,1]{1,0:T(1,128)S(6)}', space=smem, size = 0x200, scoped, tag = 'scoped memory for tpu_custom_call.1']
  #allocation3 [shape = 'f32[1,1]{1,0:T(1,128)S(6)}', space=smem, size = 0x200, scoped, tag = 'scoped memory for tpu_custom_call.1']
  %s0 = inlined_call_operand.<no memory space> [shape: f32[1,1], index: 0, kind: input, shape index: {}]
  %s1 = inlined_call_operand.<no memory space> [shape: f32[1,1], index: 1, kind: input, shape index: {}]
  %s2 = inlined_call_operand.vmem [shape: f32[1,16], index: 2, kind: input, shape index: {}]
  %s3 = inlined_call_operand.hbm [shape: f32[1,16], index: 3, kind: output, shape index: {}]
  %s4 = sld [smem:[#allocation0]]
  $region22: #{tpu_custom_call.1} parent=0
    _
  %s6 = ssub.s32 1, %s4
  %s7 = scalar_select 0, %s6, %s4
  %8 = sst [smem:[#allocation2]] %s0
  %9 = sst [smem:[#allocation3]] %s1
  $region1: #{tpu_custom_call.1} parent=0
    #allocation4 [shape = 'u8[512]{0}', space=vmem, size = 0x400, scoped, tag = 'output window, operand 0, single buffered']
    #allocation5 [shape = 's32[1]{0}', space=sflag, size = 0x4, scoped, tag = 'scoped memory for tpu_custom_call.1']
    %10 = vsyncpa [#allocation5], 0
    // Predicated region
    $region2: #{tpu_custom_call.1} parent=1 // pred_check
      _
    $region3: #{tpu_custom_call.1} parent=1 // pred_check_branch
      %12 = sbr.rel (0) target = $region5
    $region4: #{tpu_custom_call.1} parent=1 // pred_region
      _
    $region5: #{tpu_custom_call.1} parent=1 // pred_fallthru
      _
    // Predicated region
    $region6: #{tpu_custom_call.1} parent=1 // pred_check
      _
    $region7: #{tpu_custom_call.1} parent=1 // pred_check_branch
      %14 = sbr.rel (0) target = $region9
    $region8: #{tpu_custom_call.1} parent=1 // pred_region
      _
    $region9: #{tpu_custom_call.1} parent=1 // pred_fallthru
      _
    // Predicated region
    $region10: #{tpu_custom_call.1} parent=1 // pred_check
      _
    $region11: #{tpu_custom_call.1} parent=1 // pred_check_branch
      %16 = sbr.rel (0) target = $region13
    $region12: #{tpu_custom_call.1} parent=1 // pred_region
      _
    $region13: #{tpu_custom_call.1} parent=1 // pred_fallthru
      _
    %s17 = sld [smem:[#allocation2]]
    %s18 = sld [smem:[#allocation3]]
    %v19 = vld [vmem:[%s2] sm:$0x1]
    %v20 = vstv %s17
    %v21 = vmul.f32 %v19, %v20
    %v22 = vstv %s18
    %v23 = vadd.f32 %v21, %v22
    %v24 = vtanh.pop %v23
    %vm25 = vcmask 122880
    %26 = vst.msk [vmem:[#allocation4] sm:$0x1] %vm25, %v24
    // Predicated region
    $region14: #{tpu_custom_call.1} parent=1 // pred_check
      _
    $region15: #{tpu_custom_call.1} parent=1 // pred_check_branch
      %28 = sbr.rel (0) target = $region17
    $region16: #{tpu_custom_call.1} parent=1 // pred_region
      %s30 = ssub.s32 16, 16
      %31 = vsyncadd [#allocation5], %s30
      %s33 = sshll.u32 [#allocation4], 4
      %s34 = int_to_ptr.vmem [resolvable:$true] %s33
      %36 = dma.vmem_to_hbm [thread:$0]  %s34, 16, %s3, [#allocation5]
    $region17: #{tpu_custom_call.1} parent=1 // pred_fallthru
      _
    // Predicated region
    $region18: #{tpu_custom_call.1} parent=1 // pred_check
      _
    $region19: #{tpu_custom_call.1} parent=1 // pred_check_branch
      %38 = sbr.rel (0) target = $region21
    $region20: #{tpu_custom_call.1} parent=1 // pred_region
      %39 = dma.done [#allocation5], 16
    $region21: #{tpu_custom_call.1} parent=1 // pred_fallthru
      _
    %40 = vsyncpa [#allocation5], 1

</llo_original>
